<compile_context>
chip_gen: v6e
topology: v6e:2x2x1
jax: 0.10.0
libtpu: 0.0.40
codegen_flags: <defaults>
</compile_context>

<pallas_src>
import math

import jax
import jax.numpy as jnp
from jax import lax
from jax.experimental import pallas as pl
from jax.experimental.pallas import tpu as pltpu


# ---------------------------------------------------------------------------
# Pallas kernel: one lane-dense tile of tm output pixels, all Cout channels,
# with the CKK contraction split over the innermost ("arbitrary") grid axis.
#   patch_ref: (tk, tm)     masked-input im2col patch slice (zero-padded K rows)
#   msum_ref : (1, tm)      mask-conv result per output pixel (f32, exact ints)
#   w_ref    : (Cout, tk)   flattened conv weight slice (zero-padded K cols)
#   b_ref    : (Cout, 1)    bias column
#   out_ref  : (Cout, tm)
#   acc_ref  : (Cout, tm)   f32 VMEM accumulator (persistent across K steps)
# ---------------------------------------------------------------------------
def _pconv_kernel(patch_ref, msum_ref, w_ref, b_ref, out_ref, acc_ref):
    k = pl.program_id(1)

    @pl.when(k == 0)
    def _():
        acc_ref[...] = jnp.zeros_like(acc_ref)

    # input_conv(input * mask) on the MXU: (Cout, tk) @ (tk, tm), f32 accumulate.
    acc_ref[...] += jnp.dot(w_ref[...], patch_ref[...],
                            preferred_element_type=jnp.float32)

    @pl.when(k == pl.num_programs(1) - 1)
    def _():
        msum = msum_ref[...]                                   # (1, tm) f32
        holes = msum == 0.0                                    # exact: 0/1 mask sums
        inv = pl.reciprocal(jnp.where(holes, 1.0, msum), approx=True)   # EUP slot
        out = acc_ref[...] * inv + b_ref[...]                  # lane/sublane bcast
        out_ref[...] = jnp.where(holes, 0.0, out).astype(out_ref.dtype)


# ---------------------------------------------------------------------------
# im2col in transposed (CKK, M) layout; CKK ordering matches OIHW weight flatten.
# ---------------------------------------------------------------------------
def _im2col_t(x, kh, kw, stride, padding, dilation):
    """x: (N, C, H, W) -> patches (C*kh*kw, N*Hout*Wout), Hout, Wout."""
    N, C, H, W = x.shape
    xp = jnp.pad(x, ((0, 0), (0, 0), (padding, padding), (padding, padding)))
    Hp, Wp = H + 2 * padding, W + 2 * padding
    Hout = (Hp - dilation * (kh - 1) - 1) // stride + 1
    Wout = (Wp - dilation * (kw - 1) - 1) // stride + 1
    cols = []
    for i in range(kh):
        for j in range(kw):
            sl = xp[:, :,
                    i * dilation: i * dilation + stride * (Hout - 1) + 1: stride,
                    j * dilation: j * dilation + stride * (Wout - 1) + 1: stride]
            cols.append(sl)                               # (N, C, Hout, Wout)
    p = jnp.stack(cols, axis=0)                           # (kh*kw, N, C, Hout, Wout)
    p = jnp.transpose(p, (2, 0, 1, 3, 4))                 # (C, kh*kw, N, Hout, Wout)
    return p.reshape(C * kh * kw, N * Hout * Wout), Hout, Wout


def _round_up(x, m):
    return ((x + m - 1) // m) * m


def partial_conv_forward(x, mask, weight, bias, *, stride=1, padding=0,
                         dilation=1, tm=512, max_tk=1024, mxu_dtype=None):
    """PartialConv.forward. x, mask: (N, Cin, H, W); weight: (Cout, Cin, kh, kw)."""
    N, Cin, H, W = x.shape
    Cout, _, kh, kw = weight.shape

    # mask = mask[:, 1:2].repeat(1, Cin, 1, 1); pre-mask the input once in the
    # wrapper (fused NCHW elementwise) so the kernel gets a single patch stream.
    m = jnp.broadcast_to(mask[:, 1:2, :, :], (N, Cin, H, W)).astype(x.dtype)
    xm = x * m

    patches_t, Hout, Wout = _im2col_t(xm, kh, kw, stride, padding, dilation)

    # mask_conv(mask) with all-ones weight: identical for every Cout channel, so
    # compute a single-channel ones-conv in the wrapper (tiny) -> (N, 1, Ho, Wo).
    ones_w = jnp.ones((1, Cin, kh, kw), jnp.float32)
    dn = lax.conv_dimension_numbers(m.shape, ones_w.shape, ('NCHW', 'OIHW', 'NCHW'))
    msum_img = lax.conv_general_dilated(
        m.astype(jnp.float32), ones_w, (stride, stride),
        [(padding, padding)] * 2, rhs_dilation=(dilation, dilation),
        dimension_numbers=dn)                              # (N, 1, Hout, Wout) exact ints

    M = N * Hout * Wout
    CKK = Cin * kh * kw

    # --- M (pixel) tiling: big lane-dense tiles, but keep >=2 grid steps when
    # there is enough work (v7x megacore sharding over the "parallel" M axis).
    Mp128 = _round_up(M, 128)
    tm = max(128, min(tm, Mp128))
    if Mp128 >= 256 and Mp128 // tm < 2:
        tm = max(128, _round_up((Mp128 + 1) // 2, 128))
    Mp = _round_up(M, tm)

    # --- K (contraction) tiling: single step for small CKK (block equals the
    # full weight lane extent, so only %8 alignment is needed); for large CKK,
    # split into 128-aligned slices so per-step VMEM stays bounded.
    CKK8 = _round_up(CKK, 8)
    if CKK8 <= max_tk:
        tk, CKKp = CKK8, CKK8
    else:
        tk = _round_up(min(max_tk, CKK8), 128)
        CKKp = _round_up(CKK, tk)

    if Mp != M or CKKp != CKK:
        patches_t = jnp.pad(patches_t, ((0, CKKp - CKK), (0, Mp - M)))
    msum_row = jnp.pad(msum_img.reshape(1, M), ((0, 0), (0, Mp - M)))  # (1, Mp) f32

    w2 = weight.reshape(Cout, CKK)
    if CKKp != CKK:
        w2 = jnp.pad(w2, ((0, 0), (0, CKKp - CKK)))        # (Cout, CKKp)
    if bias is None:
        bias = jnp.zeros((Cout,), x.dtype)
    b2 = bias.reshape(Cout, 1).astype(jnp.float32)         # (Cout, 1)

    if mxu_dtype is not None:                              # bf16 MXU feed on v6e/v7x
        patches_t = patches_t.astype(mxu_dtype)
        w2 = w2.astype(mxu_dtype)

    out_t = pl.pallas_call(
        _pconv_kernel,
        out_shape=jax.ShapeDtypeStruct((Cout, Mp), x.dtype),
        grid_spec=pltpu.PrefetchScalarGridSpec(
            num_scalar_prefetch=0,
            grid=(Mp // tm, CKKp // tk),                       # (M tiles, K tiles)
            in_specs=[
                pl.BlockSpec((tk, tm), lambda mi, ki: (ki, mi)),   # patch slice
                pl.BlockSpec((1, tm), lambda mi, ki: (0, mi)),     # mask-sum row
                pl.BlockSpec((Cout, tk), lambda mi, ki: (0, ki)),  # weight slice
                pl.BlockSpec((Cout, 1), lambda mi, ki: (0, 0)),    # resident bias
            ],
            out_specs=pl.BlockSpec((Cout, tm), lambda mi, ki: (0, mi)),
            scratch_shapes=[pltpu.VMEM((Cout, tm), jnp.float32)],
        ),
        compiler_params=pltpu.CompilerParams(
            dimension_semantics=("parallel", "arbitrary")),
    )(patches_t, msum_row, w2, b2)

    # (Cout, M) -> (N, Cout, Hout, Wout)
    out = out_t[:, :M].reshape(Cout, N, Hout, Wout).transpose(1, 0, 2, 3)
    # new_mask is the same for every output channel: 1 where the window saw any
    # valid pixel, 0 at holes.
    new_mask = jnp.broadcast_to((msum_img != 0.0).astype(x.dtype),
                                (N, Cout, Hout, Wout))
    return out, new_mask


# ---------------------------------------------------------------------------
# Pure-JAX reference (for correctness check).
# ---------------------------------------------------------------------------
def _ref_partial_conv(x, mask, weight, bias, stride, padding, dilation):
    m = jnp.broadcast_to(mask[:, 1:2, :, :], x.shape)
    dn = lax.conv_dimension_numbers(x.shape, weight.shape, ('NCHW', 'OIHW', 'NCHW'))
    out = lax.conv_general_dilated(
        x * m, weight, (stride, stride), [(padding, padding)] * 2,
        rhs_dilation=(dilation, dilation), dimension_numbers=dn)
    b = bias.reshape(1, -1, 1, 1)
    out = out + b
    mout = lax.conv_general_dilated(
        m, jnp.ones_like(weight), (stride, stride), [(padding, padding)] * 2,
        rhs_dilation=(dilation, dilation), dimension_numbers=dn)
    holes = mout == 0.0
    msf = jnp.where(holes, 1.0, mout)
    out_pre = (out - b) / msf + b
    out = jnp.where(holes, 0.0, out_pre)
    new_mask = jnp.where(holes, 0.0, 1.0)
    return out, new_mask


if __name__ == "__main__":
    key = jax.random.PRNGKey(0)
    k_x, k_m, k_w = jax.random.split(key, 3)

    # PartialConv(in_channels=4, out_channels=8, kernel_size=3, stride=1, padding=1)
    in_channels, out_channels, ksize, stride, padding, dilation = 4, 8, 3, 1, 1, 1
    N, H, W = 2, 16, 16

    x = jax.random.normal(k_x, (N, in_channels, H, W), dtype=jnp.float32)
    mask = (jax.random.uniform(k_m, (N, in_channels, H, W)) > 0.5).astype(jnp.float32)

    # weights_init('kaiming'): kaiming_normal_(a=0, fan_in) -> std = sqrt(2/fan_in)
    fan_in = in_channels * ksize * ksize
    weight = jax.random.normal(
        k_w, (out_channels, in_channels, ksize, ksize), dtype=jnp.float32
    ) * (math.sqrt(2.0) / math.sqrt(fan_in))
    bias = jnp.zeros((out_channels,), dtype=jnp.float32)   # nn.init.constant_(bias, 0.0)

    out, new_mask = partial_conv_forward(
        x, mask, weight, bias, stride=stride, padding=padding, dilation=dilation)
    jax.block_until_ready((out, new_mask))

    ref_out, ref_mask = _ref_partial_conv(x, mask, weight, bias, stride, padding, dilation)
    assert out.shape == (N, out_channels, H, W) and new_mask.shape == out.shape
    # slightly loose tolerance: renormalization uses the EUP approximate reciprocal
    assert jnp.allclose(out, ref_out, atol=5e-3, rtol=5e-3)
    assert jnp.allclose(new_mask, ref_mask)

    print("KERNEL_OK")
</pallas_src>

<mosaic_0001>
module attributes {stable_mosaic.version = 11 : i64} {
  func.func @_pconv_kernel(%arg0: i32, %arg1: i32, %arg2: memref<40x256xf32, #tpu.memory_space<vmem>>, %arg3: memref<1x256xf32, #tpu.memory_space<vmem>>, %arg4: memref<8x40xf32, #tpu.memory_space<vmem>>, %arg5: memref<8x1xf32, #tpu.memory_space<vmem>>, %arg6: memref<8x256xf32, #tpu.memory_space<vmem>>, %arg7: memref<8x256xf32, #tpu.memory_space<vmem>>) attributes {dimension_semantics = [#tpu.dimension_semantics<parallel>, #tpu.dimension_semantics<arbitrary>], iteration_bounds = array<i64: 2, 1>, scalar_prefetch = 0 : i64, scratch_operands = 1 : i64, tpu.core_type = #tpu.core_type<tc>, window_params = [{transform_indices = @transform_0, window_bounds = array<i64: 40, 256>}, {transform_indices = @transform_1, window_bounds = array<i64: 1, 256>}, {transform_indices = @transform_2, window_bounds = array<i64: 8, 40>}, {pipeline_mode = #tpu.pipeline_mode<synchronous>, transform_indices = @transform_3, window_bounds = array<i64: 8, 1>}, {transform_indices = @transform_4, window_bounds = array<i64: 8, 256>}]} {
    %c0_i32 = arith.constant 0 : i32
    %0 = arith.cmpi eq, %arg1, %c0_i32 : i32
    %1 = arith.extui %0 : i1 to i32
    %c0_i32_0 = arith.constant 0 : i32
    %2 = arith.cmpi ne, %1, %c0_i32_0 : i32
    scf.if %2 {
      %cst_10 = arith.constant 0.000000e+00 : f32
      %12 = vector.broadcast %cst_10 : f32 to vector<8x256xf32>
      %c0_11 = arith.constant 0 : index
      %c0_12 = arith.constant 0 : index
      %13 = vector.load %arg7[%c0_11, %c0_12] : memref<8x256xf32, #tpu.memory_space<vmem>>, vector<8x256xf32>
      tpu.vector_store %arg7[%c0_11, %c0_12], %12 {strides = array<i32>} : memref<8x256xf32, #tpu.memory_space<vmem>>, vector<8x256xf32>,
    } else {
    }
    %c0 = arith.constant 0 : index
    %c0_1 = arith.constant 0 : index
    %3 = vector.load %arg7[%c0, %c0_1] : memref<8x256xf32, #tpu.memory_space<vmem>>, vector<8x256xf32>
    %c0_2 = arith.constant 0 : index
    %c0_3 = arith.constant 0 : index
    %4 = vector.load %arg4[%c0_2, %c0_3] : memref<8x40xf32, #tpu.memory_space<vmem>>, vector<8x40xf32>
    %c0_4 = arith.constant 0 : index
    %c0_5 = arith.constant 0 : index
    %5 = vector.load %arg2[%c0_4, %c0_5] : memref<40x256xf32, #tpu.memory_space<vmem>>, vector<40x256xf32>
    %cst = arith.constant dense<0.000000e+00> : vector<8x256xf32>
    %6 = tpu.matmul %4, %5, %cst {dimension_numbers = #tpu.dot_dimension_numbers<[1], [0], [0], [1], [0, 0, 1, 1], [], []>} : vector<8x40xf32>, vector<40x256xf32>, vector<8x256xf32> -> vector<8x256xf32>
    %7 = arith.addf %3, %6 : vector<8x256xf32>
    %c0_6 = arith.constant 0 : index
    %c0_7 = arith.constant 0 : index
    %8 = vector.load %arg7[%c0_6, %c0_7] : memref<8x256xf32, #tpu.memory_space<vmem>>, vector<8x256xf32>
    tpu.vector_store %arg7[%c0_6, %c0_7], %7 {strides = array<i32>} : memref<8x256xf32, #tpu.memory_space<vmem>>, vector<8x256xf32>,
    %c0_i32_8 = arith.constant 0 : i32
    %9 = arith.cmpi eq, %arg1, %c0_i32_8 : i32
    %10 = arith.extui %9 : i1 to i32
    %c0_i32_9 = arith.constant 0 : i32
    %11 = arith.cmpi ne, %10, %c0_i32_9 : i32
    scf.if %11 {
      %c0_10 = arith.constant 0 : index
      %c0_11 = arith.constant 0 : index
      %12 = vector.load %arg3[%c0_10, %c0_11] : memref<1x256xf32, #tpu.memory_space<vmem>>, vector<1x256xf32>
      %cst_12 = arith.constant 0.000000e+00 : f32
      %13 = vector.broadcast %cst_12 : f32 to vector<1x256xf32>
      %14 = arith.cmpf oeq, %12, %13 : vector<1x256xf32>
      %cst_13 = arith.constant 1.000000e+00 : f32
      %15 = vector.broadcast %cst_13 : f32 to vector<1x256xf32>
      %16 = arith.select %14, %15, %12 : vector<1x256xi1>, vector<1x256xf32>
      %17 = tpu.reciprocal %16 {approx = true} : vector<1x256xf32> -> vector<1x256xf32>
      %c0_14 = arith.constant 0 : index
      %c0_15 = arith.constant 0 : index
      %18 = vector.load %arg7[%c0_14, %c0_15] : memref<8x256xf32, #tpu.memory_space<vmem>>, vector<8x256xf32>
      %19 = vector.broadcast %17 : vector<1x256xf32> to vector<8x256xf32>
      %20 = arith.mulf %18, %19 : vector<8x256xf32>
      %c0_16 = arith.constant 0 : index
      %c0_17 = arith.constant 0 : index
      %21 = vector.load %arg5[%c0_16, %c0_17] : memref<8x1xf32, #tpu.memory_space<vmem>>, vector<8x1xf32>
      %22 = vector.broadcast %21 : vector<8x1xf32> to vector<8x256xf32>
      %23 = arith.addf %20, %22 : vector<8x256xf32>
      %cst_18 = arith.constant 0.000000e+00 : f32
      %24 = vector.shape_cast %14 : vector<1x256xi1> to vector<1x256xi1>
      %25 = vector.broadcast %24 : vector<1x256xi1> to vector<8x256xi1>
      %26 = vector.broadcast %cst_18 : f32 to vector<8x256xf32>
      %27 = arith.select %25, %26, %23 : vector<8x256xi1>, vector<8x256xf32>
      %c0_19 = arith.constant 0 : index
      %c0_20 = arith.constant 0 : index
      %28 = vector.load %arg6[%c0_19, %c0_20] : memref<8x256xf32, #tpu.memory_space<vmem>>, vector<8x256xf32>
      tpu.vector_store %arg6[%c0_19, %c0_20], %27 {strides = array<i32>} : memref<8x256xf32, #tpu.memory_space<vmem>>, vector<8x256xf32>,
    } else {
    }
    return
  }
  func.func @transform_0(%arg0: i32, %arg1: i32) -> (i32, i32) {
    %c0_i32 = arith.constant 0 : i32
    return %arg1, %arg0 : i32, i32
  }
  func.func @transform_1(%arg0: i32, %arg1: i32) -> (i32, i32) {
    %c0_i32 = arith.constant 0 : i32
    %c0_i32_0 = arith.constant 0 : i32
    return %c0_i32, %arg0 : i32, i32
  }
  func.func @transform_2(%arg0: i32, %arg1: i32) -> (i32, i32) {
    %c0_i32 = arith.constant 0 : i32
    %c0_i32_0 = arith.constant 0 : i32
    return %c0_i32, %arg1 : i32, i32
  }
  func.func @transform_3(%arg0: i32, %arg1: i32) -> (i32, i32) {
    %c0_i32 = arith.constant 0 : i32
    %c0_i32_0 = arith.constant 0 : i32
    %c0_i32_1 = arith.constant 0 : i32
    return %c0_i32, %c0_i32_0 : i32, i32
  }
  func.func @transform_4(%arg0: i32, %arg1: i32) -> (i32, i32) {
    %c0_i32 = arith.constant 0 : i32
    %c0_i32_0 = arith.constant 0 : i32
    return %c0_i32, %arg0 : i32, i32
  }
}

</mosaic_0001>

<llo_original>
// kernel: tpu_custom_call.1
$region0: #{tpu_custom_call.1}
  #allocation0 [shape = 'u32[]', space=smem, size = 0x4, offset = 0x4, fixed_abs, tag = 'smem constant byte address 0x4 - core index']
  #allocation1 [shape = 'u32[144,128]{1,0:T(1,128)}', space=vmem, size = 0x12000, scoped, tag = 'internal scratch']
  #allocation2 [shape = 'f32[8,256]{1,0:T(8,128)}', space=vmem, size = 0x2000, scoped, tag = 'scratch operand']
  %s0 = inlined_call_operand.hbm [shape: f32[40,512], index: 0, kind: input, shape index: {}]
  %s1 = inlined_call_operand.vmem [shape: f32[1,512], index: 1, kind: input, shape index: {}]
  %s2 = inlined_call_operand.vmem [shape: f32[8,40], index: 2, kind: input, shape index: {}]
  %s3 = inlined_call_operand.vmem [shape: f32[8,1], index: 3, kind: input, shape index: {}]
  %s4 = inlined_call_operand.hbm [shape: f32[8,512], index: 4, kind: output, shape index: {}]
  %s5 = sld [smem:[#allocation0]]
  $region61: #{tpu_custom_call.1} parent=0
    _
  %s7 = ssub.s32 1, %s5
  %s8 = scalar_select 0, %s7, %s5
  $region1: #{tpu_custom_call.1} parent=0
    #allocation3 [shape = 'u8[81920]{0}', space=vmem, size = 0x14000, scoped, tag = 'input window, operand 0']
    #allocation4 [shape = 's32[2]{0}', space=sflag, size = 0x8, scoped, tag = 'scoped memory for tpu_custom_call.1']
    #allocation5 [shape = 's32[2]{0}', space=sflag, size = 0x8, scoped, tag = 'scoped memory for tpu_custom_call.1']
    #allocation6 [shape = 'u8[16384]{0}', space=vmem, size = 0x4000, scoped, tag = 'output window, operand 0']
    %9 = vsyncpa [#allocation4], 0
    %s10 = scalar_lea.sflag [#allocation4], 1
    %11 = vsyncpa %s10, 0
    %12 = vsyncpa [#allocation5], 0
    %s13 = scalar_lea.sflag [#allocation5], 1
    %14 = vsyncpa %s13, 0
    loop: start=0, step=1, limit=4
    $region2: #{tpu_custom_call.1} parent=1 // loop_pre_header
      _
    $region3: #{tpu_custom_call.1} parent=1 // loop_header
      %s16 = sphi 0, %s20
      %p17 = scmp.ge.s32.totalorder %s16, 4
      %s23 = sphi 0, %s35
      %s24 = sphi 0, %s31
      %s25 = sphi 0, %s23
      %s26 = sphi 0, %s24
      %s27 = sphi 0, %s25
      %s28 = sphi 0, %s26
      %s40 = sphi 0, %s42
      %s43 = sphi 0, %s40
      %s44 = sphi 0, %s43
      %s60 = sphi 0, %s44
      %s66 = sphi 0, %s68
      %s69 = sphi 0, %s66
      %s70 = sphi 0, %s69
      %s86 = sphi 0, %s70
      %s92 = sphi 0, %s94
      %s95 = sphi 0, %s92
      %s96 = sphi 0, %s95
      %s112 = sphi 0, %s96
      %s116 = sphi 0, %s116
      %s118 = sphi 0, %s116
      %s119 = sphi 0, %s118
      %s133 = sphi 0, %s119
      %s139 = sphi 0, %s141
      %s142 = sphi 0, %s139
      %s143 = sphi 0, %s142
      %s159 = sphi 0, %s143
    $region4: #{tpu_custom_call.1} parent=1 // loop_header_branch
      %19 = sbr.rel (%p17) target = $region8
    $region5: #{tpu_custom_call.1} parent=1 // loop_body
      %s21 = ssub.s32 %s16, 1
      %s22 = ssub.s32 %s16, 2
      %s29 = sadd.s32 1, %s24
      %p30 = scmp.ge.s32.totalorder %s29, 1
      %s31 = scalar_select %p30, 0, %s29
      %s32 = sadd.s32 1, %s23
      %s33 = scalar_select %p30, %s32, %s23
      %p34 = scmp.ge.s32.totalorder %s33, 2
      %s35 = scalar_select %p34, 0, %s33
      %s36 = ssub.s32 %s24, %s31
      %s37 = ssub.s32 %s23, %s35
      %s38 = sor.u32 %s36, %s37
      %p39 = scmp.eq.s32.totalorder %s38, 0
      %s41 = sadd.s32 %s40, 1
      %s42 = scalar_select %p39, %s40, %s41
      %p45 = pneg %p39
      %p46 = scmp.eq.s32.totalorder %s16, 1
      %p47 = por %p45, %p46
      %p48 = scmp.ne.s32.totalorder %s40, %s43
      %p49 = scmp.eq.s32.totalorder %s16, 0
      %p50 = por %p48, %p49
      %p51 = scmp.ne.s32.totalorder %s40, %s43
      %p52 = scmp.eq.s32.totalorder %s21, 1
      %p53 = por %p51, %p52
      %p54 = scmp.ne.s32.totalorder %s43, %s44
      %p55 = scmp.eq.s32.totalorder %s21, 0
      %p56 = por %p54, %p55
      %p57 = scmp.ne.s32.totalorder %s43, %s44
      %p58 = scmp.eq.s32.totalorder %s22, 1
      %p59 = por %p57, %p58
      %p61 = scmp.ne.s32.totalorder %s44, %s60
      %p62 = scmp.eq.s32.totalorder %s22, 0
      %p63 = por %p61, %p62
      %s64 = ssub.s32 %s23, %s35
      %p65 = scmp.eq.s32.totalorder %s64, 0
      %s67 = sadd.s32 %s66, 1
      %s68 = scalar_select %p65, %s66, %s67
      %p71 = pneg %p65
      %p72 = scmp.eq.s32.totalorder %s16, 1
      %p73 = por %p71, %p72
      %p74 = scmp.ne.s32.totalorder %s66, %s69
      %p75 = scmp.eq.s32.totalorder %s16, 0
      %p76 = por %p74, %p75
      %p77 = scmp.ne.s32.totalorder %s66, %s69
      %p78 = scmp.eq.s32.totalorder %s21, 1
      %p79 = por %p77, %p78
      %p80 = scmp.ne.s32.totalorder %s69, %s70
      %p81 = scmp.eq.s32.totalorder %s21, 0
      %p82 = por %p80, %p81
      %p83 = scmp.ne.s32.totalorder %s69, %s70
      %p84 = scmp.eq.s32.totalorder %s22, 1
      %p85 = por %p83, %p84
      %p87 = scmp.ne.s32.totalorder %s70, %s86
      %p88 = scmp.eq.s32.totalorder %s22, 0
      %p89 = por %p87, %p88
      %s90 = ssub.s32 %s24, %s31
      %p91 = scmp.eq.s32.totalorder %s90, 0
      %s93 = sadd.s32 %s92, 1
      %s94 = scalar_select %p91, %s92, %s93
      %p97 = pneg %p91
      %p98 = scmp.eq.s32.totalorder %s16, 1
      %p99 = por %p97, %p98
      %p100 = scmp.ne.s32.totalorder %s92, %s95
      %p101 = scmp.eq.s32.totalorder %s16, 0
      %p102 = por %p100, %p101
      %p103 = scmp.ne.s32.totalorder %s92, %s95
      %p104 = scmp.eq.s32.totalorder %s21, 1
      %p105 = por %p103, %p104
      %p106 = scmp.ne.s32.totalorder %s95, %s96
      %p107 = scmp.eq.s32.totalorder %s21, 0
      %p108 = por %p106, %p107
      %p109 = scmp.ne.s32.totalorder %s95, %s96
      %p110 = scmp.eq.s32.totalorder %s22, 1
      %p111 = por %p109, %p110
      %p113 = scmp.ne.s32.totalorder %s96, %s112
      %p114 = scmp.eq.s32.totalorder %s22, 0
      %p115 = por %p113, %p114
      %s117 = sadd.s32 %s116, 1
      %p120 = scmp.eq.s32.totalorder %s16, 1
      %p121 = scmp.ne.s32.totalorder %s116, %s118
      %p122 = scmp.eq.s32.totalorder %s16, 0
      %p123 = por %p121, %p122
      %p124 = scmp.ne.s32.totalorder %s116, %s118
      %p125 = scmp.eq.s32.totalorder %s21, 1
      %p126 = por %p124, %p125
      %p127 = scmp.ne.s32.totalorder %s118, %s119
      %p128 = scmp.eq.s32.totalorder %s21, 0
      %p129 = por %p127, %p128
      %p130 = scmp.ne.s32.totalorder %s118, %s119
      %p131 = scmp.eq.s32.totalorder %s22, 1
      %p132 = por %p130, %p131
      %p134 = scmp.ne.s32.totalorder %s119, %s133
      %p135 = scmp.eq.s32.totalorder %s22, 0
      %p136 = por %p134, %p135
      %s137 = ssub.s32 %s23, %s35
      %p138 = scmp.eq.s32.totalorder %s137, 0
      %s140 = sadd.s32 %s139, 1
      %s141 = scalar_select %p138, %s139, %s140
      %p144 = pneg %p138
      %p145 = scmp.eq.s32.totalorder %s16, 1
      %p146 = por %p144, %p145
      %p147 = scmp.ne.s32.totalorder %s139, %s142
      %p148 = scmp.eq.s32.totalorder %s16, 0
      %p149 = por %p147, %p148
      %p150 = scmp.ne.s32.totalorder %s139, %s142
      %p151 = scmp.eq.s32.totalorder %s21, 1
      %p152 = por %p150, %p151
      %p153 = scmp.ne.s32.totalorder %s142, %s143
      %p154 = scmp.eq.s32.totalorder %s21, 0
      %p155 = por %p153, %p154
      %p156 = scmp.ne.s32.totalorder %s142, %s143
      %p157 = scmp.eq.s32.totalorder %s22, 1
      %p158 = por %p156, %p157
      %p160 = scmp.ne.s32.totalorder %s143, %s159
      %p161 = scmp.eq.s32.totalorder %s22, 0
      %p162 = por %p160, %p161
      %p163 = scmp.le.s32.totalorder 1, %s16
      %p164 = scmp.lt.s32.totalorder %s16, 3
      %p165 = pnand %p163, %p164
      %p166 = pneg %p165
      // Predicated region
      $region9: #{tpu_custom_call.1} parent=5 // pred_check
        _
      $region10: #{tpu_custom_call.1} parent=5 // pred_check_branch
        %168 = sbr.rel (%p165) target = $region12
      $region11: #{tpu_custom_call.1} parent=5 // pred_region
        %s169 = ssub.s32 %s16, 1
        // Predicated region
        $region13: #{tpu_custom_call.1} parent=11 // pred_check
          %p170 = pneg %p108
        $region14: #{tpu_custom_call.1} parent=11 // pred_check_branch
          %172 = sbr.rel (%p170) target = $region16
        $region15: #{tpu_custom_call.1} parent=11 // pred_region
          %p173 = scmp.lt.s32.totalorder %s26, 0
          %s174 = scalar_select %p173, %s26, 0
          %s175 = smul.addr %s174, 8
          %s176 = scalar_lea.vmem %s2, %s175
        $region16: #{tpu_custom_call.1} parent=11 // pred_fallthru
          _
        // Predicated region
        $region17: #{tpu_custom_call.1} parent=11 // pred_check
          %p177 = pneg %p129
        $region18: #{tpu_custom_call.1} parent=11 // pred_check_branch
          %179 = sbr.rel (%p177) target = $region20
        $region19: #{tpu_custom_call.1} parent=11 // pred_region
          _
        $region20: #{tpu_custom_call.1} parent=11 // pred_fallthru
          _
      $region12: #{tpu_custom_call.1} parent=5 // pred_fallthru
        _
      %p180 = scmp.lt.s32.totalorder %s16, 2
      // Predicated region
      $region21: #{tpu_custom_call.1} parent=5 // pred_check
        %p181 = pneg %p180
      $region22: #{tpu_custom_call.1} parent=5 // pred_check_branch
        %183 = sbr.rel (%p181) target = $region24
      $region23: #{tpu_custom_call.1} parent=5 // pred_region
        // Predicated region
        $region25: #{tpu_custom_call.1} parent=23 // pred_check
          %p184 = pneg %p50
        $region26: #{tpu_custom_call.1} parent=23 // pred_check_branch
          %186 = sbr.rel (%p184) target = $region28
        $region27: #{tpu_custom_call.1} parent=23 // pred_region
          %s187 = sand.u32 %s40, 1
          %s188 = scalar_lea.sflag [#allocation4], %s187
          %s189 = sand.u32 %s40, 1
          %s190 = smul.addr %s189, 80
          %s191 = scalar_lea.vmem [#allocation3], %s190
          %s192 = smul.u32 5, %s24
          %s193 = smul.u32 2, %s23
          %s195 = ssub.s32 1280, 1280
          %196 = vsyncadd %s188, %s195
          %s197 = smul.addr %s192, 4
          %s198 = sadd.s32 %s193, %s197
          %s199 = smul.addr %s198, 128
          %s200 = scalar_lea.hbm %s0, %s199
          %s201 = sshll.u32 %s191, 4
          %s202 = int_to_ptr.vmem [resolvable:$true] %s201
          %207 = dma.hbm_to_vmem [thread:$0]  %s200, 1280, %s202, %s188, 512, 256, 16
        $region28: #{tpu_custom_call.1} parent=23 // pred_fallthru
          _
        // Predicated region
        $region29: #{tpu_custom_call.1} parent=23 // pred_check
          %p208 = pneg %p76
        $region30: #{tpu_custom_call.1} parent=23 // pred_check_branch
          %210 = sbr.rel (%p208) target = $region32
        $region31: #{tpu_custom_call.1} parent=23 // pred_region
          %s211 = smul.u32 2, %s23
          %p212 = scmp.lt.s32.totalorder %s211, 3
          %s213 = scalar_select %p212, %s211, 3
          %s214 = scalar_lea.vmem %s1, %s213
          %s215 = smul.u32 2, %s23
        $region32: #{tpu_custom_call.1} parent=23 // pred_fallthru
          _
      $region24: #{tpu_custom_call.1} parent=5 // pred_fallthru
        _
      %p216 = scmp.le.s32.totalorder 1, %s16
      %p217 = scmp.lt.s32.totalorder %s16, 3
      %p218 = pnand %p216, %p217
      %p219 = pneg %p218
      // Predicated region
      $region33: #{tpu_custom_call.1} parent=5 // pred_check
        _
      $region34: #{tpu_custom_call.1} parent=5 // pred_check_branch
        %221 = sbr.rel (%p218) target = $region36
      $region35: #{tpu_custom_call.1} parent=5 // pred_region
        %s222 = ssub.s32 %s16, 1
        %s223 = sand.u32 %s43, 1
        %s224 = scalar_lea.sflag [#allocation4], %s223
        %s225 = sand.u32 %s43, 1
        %s226 = smul.addr %s225, 80
        %s227 = scalar_lea.vmem [#allocation3], %s226
        // Predicated region
        $region37: #{tpu_custom_call.1} parent=35 // pred_check
          %p228 = pneg %p56
        $region38: #{tpu_custom_call.1} parent=35 // pred_check_branch
          %230 = sbr.rel (%p228) target = $region40
        $region39: #{tpu_custom_call.1} parent=35 // pred_region
          %231 = dma.done %s224, 1280
        $region40: #{tpu_custom_call.1} parent=35 // pred_fallthru
          _
        %s232 = sand.u32 %s43, 1
        %s233 = scalar_lea.sflag [#allocation4], %s232
        %s234 = sand.u32 %s43, 1
        %s235 = smul.addr %s234, 80
        %s236 = scalar_lea.vmem [#allocation3], %s235
        %p237 = pneg %p56
        %p238 = pneg %p53
        %s239 = smul.u32 2, %s25
        %p240 = scmp.lt.s32.totalorder %s239, 3
        %s241 = scalar_select %p240, %s239, 3
        %s242 = scalar_lea.vmem %s1, %s241
        %p243 = pneg %p82
        %p244 = pneg %p79
        %p245 = scmp.lt.s32.totalorder %s26, 0
        %s246 = scalar_select %p245, %s26, 0
        %s247 = smul.addr %s246, 8
        %s248 = scalar_lea.vmem %s2, %s247
        %p249 = pneg %p108
        %p250 = pneg %p105
        %p251 = pneg %p129
        %p252 = pneg %p126
        %p253 = pneg %p155
        %p254 = pneg %p152
        %s255 = sand.u32 %s142, 1
        %s256 = scalar_lea.sflag [#allocation5], %s255
        %s257 = sand.u32 %s142, 1
        %s258 = smul.addr %s257, 16
        %s259 = scalar_lea.vmem [#allocation6], %s258
        %s260 = smul.u32 5, %s26
        %s261 = smul.u32 2, %s25
        %s262 = smul.u32 2, %s25
        %p263 = scmp.lt.s32.totalorder %s262, 3
        %s264 = scalar_select %p263, %s262, 3
        %s265 = scalar_lea.vmem %s1, %s264
        %s266 = smul.u32 2, %s25
        %p267 = scmp.lt.s32.totalorder %s26, 0
        %s268 = scalar_select %p267, %s26, 0
        %s269 = smul.addr %s268, 8
        %s270 = scalar_lea.vmem %s2, %s269
        %s271 = smul.u32 2, %s25
        %p272 = scmp.eq.s32.totalorder %s26, 0
        // Predicated region
        $region41: #{tpu_custom_call.1} parent=35 // pred_check
          %p273 = pneg %p272
        $region42: #{tpu_custom_call.1} parent=35 // pred_check_branch
          %275 = sbr.rel (%p273) target = $region44
        $region43: #{tpu_custom_call.1} parent=35 // pred_region
          %276 = vst [vmem:[#allocation2] sm:$0xff] 0.0
          %277 = vst [vmem:[#allocation2 + $0x8] sm:$0xff] 0.0
        $region44: #{tpu_custom_call.1} parent=35 // pred_fallthru
          _
        %v278 = vld [vmem:[#allocation2] sm:$0xff]
        %v279 = vld [vmem:[#allocation2 + $0x8] sm:$0xff]
        %v280 = vld [vmem:[%s270] sm:$0xff]
        %v281 = vld [vmem:[%s227] sm:$0xff]
        %v282 = vld [vmem:[%s227 + $0x8] sm:$0xff]
        %v283 = vld [vmem:[%s227 + $0x10] sm:$0xff]
        %v284 = vld [vmem:[%s227 + $0x18] sm:$0xff]
        %v285 = vld [vmem:[%s227 + $0x20] sm:$0xff]
        %v286 = vld [vmem:[%s227 + $0x28] sm:$0xff]
        %v287 = vld [vmem:[%s227 + $0x30] sm:$0xff]
        %v288 = vld [vmem:[%s227 + $0x38] sm:$0xff]
        %v289 = vld [vmem:[%s227 + $0x40] sm:$0xff]
        %v290 = vld [vmem:[%s227 + $0x48] sm:$0xff]
        %vm291 = vcmask 326656
        %v293 = vsel %vm291, %v280, 0
        %295 = vmatprep.subr.mxu0 0.0
        %296 = vmatpush1.msra.mxu0 0.0
        %297 = vmatprep.subr.mxu0 0.0
        %298 = vmatpush1.msra.mxu0 0.0
        %299 = vmatprep.subr.mxu0 0.0
        %300 = vmatpush1.msra.mxu0 0.0
        %301 = vmatprep.subr.mxu0 0.0
        %302 = vmatpush1.msra.mxu0 0.0
        %303 = vmatprep.subr.mxu0 0.0
        %304 = vmatpush1.msra.mxu0 0.0
        %305 = vmatprep.subr.mxu0 0.0
        %306 = vmatpush1.msra.mxu0 0.0
        %307 = vmatprep.subr.mxu0 0.0
        %308 = vmatpush1.msra.mxu0 0.0
        %309 = vmatprep.subr.mxu0 0.0
        %310 = vmatpush1.msra.mxu0 0.0
        %311 = vmatprep.subr.mxu0 0.0
        %312 = vmatpush1.msra.mxu0 0.0
        %313 = vmatprep.subr.mxu0 0.0
        %314 = vmatpush1.msra.mxu0 0.0
        %315 = vmatprep.subr.mxu0 0.0
        %316 = vmatpush1.msra.mxu0 0.0
        %317 = vmatprep.subr.mxu0 %v290
        %318 = vmatpush1.msra.mxu0 %v289
        %319 = vmatprep.subr.mxu0 %v288
        %320 = vmatpush1.msra.mxu0 %v287
        %321 = vmatprep.subr.mxu0 %v286
        %322 = vmatpush1.msra.mxu0 %v285
        %323 = vmatprep.subr.mxu0 %v284
        %324 = vmatpush1.msra.mxu0 %v283
        %325 = vmatprep.subr.mxu0 %v282
        %326 = vmatpush1.msra.mxu0 %v281
        %327 = vmatprep.subr.mxu0 0.0
        %328 = vmatpush2.msra.mxu0 0.0
        %329 = vmatprep.subr.mxu0 0.0
        %330 = vmatpush2.msra.mxu0 0.0
        %331 = vmatprep.subr.mxu0 0.0
        %332 = vmatpush2.msra.mxu0 0.0
        %333 = vmatprep.subr.mxu0 0.0
        %334 = vmatpush2.msra.mxu0 0.0
        %335 = vmatprep.subr.mxu0 0.0
        %336 = vmatpush2.msra.mxu0 0.0
        %337 = vmatprep.subr.mxu0 0.0
        %338 = vmatpush2.msra.mxu0 0.0
        %339 = vmatprep.subr.mxu0 0.0
        %340 = vmatpush2.msra.mxu0 0.0
        %341 = vmatprep.subr.mxu0 0.0
        %342 = vmatpush2.msra.mxu0 0.0
        %343 = vmatprep.subr.mxu0 0.0
        %344 = vmatpush2.msra.mxu0 0.0
        %345 = vmatprep.subr.mxu0 0.0
        %346 = vmatpush2.msra.mxu0 0.0
        %347 = vmatprep.subr.mxu0 0.0
        %348 = vmatpush2.msra.mxu0 0.0
        %349 = vmatprep.subr.mxu0 0.0
        %350 = vmatpush2.msra.mxu0 0.0
        %351 = vmatprep.subr.mxu0 0.0
        %352 = vmatpush2.msra.mxu0 0.0
        %353 = vmatprep.subr.mxu0 0.0
        %354 = vmatpush2.msra.mxu0 0.0
        %355 = vmatprep.subr.mxu0 0.0
        %356 = vmatpush2.msra.mxu0 0.0
        %357 = vmatprep.subr.mxu0 0.0
        %358 = vmatpush2.msra.mxu0 0.0
        %359 = vmatprep.mubr.f32.mxu0 0.0
        %360 = vmatmul.mubr.f32.gmra.mxu0 %v293
        %v361 = vpop.f32.mrf.mxu0
        %v362 = vadd.f32 0.0, %v361
        %v363 = vpop.f32.mrf.mxu0
        %v364 = vadd.f32 0.0, %v363
        %365 = vdwg.mxu0
        %v366 = vadd.f32 %v278, %v362
        %v367 = vadd.f32 %v279, %v364
        %368 = vst [vmem:[#allocation2] sm:$0xff] %v366
        %369 = vst [vmem:[#allocation2 + $0x8] sm:$0xff] %v367
        // Predicated region
        $region45: #{tpu_custom_call.1} parent=35 // pred_check
          %p370 = pneg %p272
        $region46: #{tpu_custom_call.1} parent=35 // pred_check_branch
          %372 = sbr.rel (%p370) target = $region48
        $region47: #{tpu_custom_call.1} parent=35 // pred_region
          %v373 = vld [vmem:[%s265] sm:$0x3]
          %vm374 = vcmp.eq.f32.partialorder %v373, 0.0
          %v375 = vsel %vm374, 1.0, %v373
          %v376 = vrcp.pop %v375
          %v377 = vld [vmem:[#allocation2] sm:$0xff]
          %v378 = vld [vmem:[#allocation2 + $0x8] sm:$0xff]
          %v380 = vlaneseq
          %v381 = vshrl.u32 %v380, 7
          %v382 = vsub.s32 0, %v381
          %v383 = vrot.slane %v376, %v382
          %v384 = vlaneseq
          %v385 = vshrl.u32 %v384, 7
          %v386 = vsub.s32 1, %v385
          %v387 = vrot.slane %v376, %v386
          %v390 = vmul.f32 %v377, %v383
          %v391 = vmul.f32 %v378, %v387
          %v392 = vld [vmem:[%s3] sm:$0xff]
          %394 = vset.pattern.permute.xlu0 0
          %395 = vperm.xlu0 %394, %v392
          %v396 = vpop.permute.xlu0 %395
          %v398 = vadd.f32 %v390, %v396
          %v399 = vadd.f32 %v391, %v396
          %v400 = vsel %vm374, 1, 0
          %v401 = vlaneseq
          %v402 = vshrl.u32 %v401, 7
          %v403 = vsub.s32 0, %v402
          %v404 = vrot.slane %v400, %v403
          %v405 = vlaneseq
          %v406 = vshrl.u32 %v405, 7
          %v407 = vsub.s32 1, %v406
          %v408 = vrot.slane %v400, %v407
          %vm409 = vcmp.eq.s32.totalorder %v404, 1
          %vm410 = vcmp.eq.s32.totalorder %v408, 1
          %v411 = vsel %vm409, 0.0, %v398
          %v412 = vsel %vm410, 0.0, %v399
          %413 = vst [vmem:[%s259] sm:$0xff] %v411
          %414 = vst [vmem:[%s259 + $0x8] sm:$0xff] %v412
        $region48: #{tpu_custom_call.1} parent=35 // pred_fallthru
          _
        %s415 = sand.u32 %s142, 1
        %s416 = scalar_lea.sflag [#allocation5], %s415
        %s417 = sand.u32 %s142, 1
        %s418 = smul.addr %s417, 16
        %s419 = scalar_lea.vmem [#allocation6], %s418
        // Predicated region
        $region49: #{tpu_custom_call.1} parent=35 // pred_check
          %p420 = pneg %p152
        $region50: #{tpu_custom_call.1} parent=35 // pred_check_branch
          %422 = sbr.rel (%p420) target = $region52
        $region51: #{tpu_custom_call.1} parent=35 // pred_region
          %s423 = smul.u32 2, %s25
          %s425 = ssub.s32 256, 256
          %426 = vsyncadd %s416, %s425
          %s427 = smul.addr %s423, 128
          %s428 = scalar_lea.hbm %s4, %s427
          %s430 = sshll.u32 %s419, 4
          %s431 = int_to_ptr.vmem [resolvable:$true] %s430
          %433 = dma.vmem_to_hbm [thread:$0]  %s431, 256, %s428, %s416
        $region52: #{tpu_custom_call.1} parent=35 // pred_fallthru
          _
      $region36: #{tpu_custom_call.1} parent=5 // pred_fallthru
        _
      %p434 = scmp.le.s32.totalorder 2, %s16
      // Predicated region
      $region53: #{tpu_custom_call.1} parent=5 // pred_check
        %p435 = pneg %p434
      $region54: #{tpu_custom_call.1} parent=5 // pred_check_branch
        %437 = sbr.rel (%p435) target = $region56
      $region55: #{tpu_custom_call.1} parent=5 // pred_region
        %s438 = ssub.s32 %s16, 2
        // Predicated region
        $region57: #{tpu_custom_call.1} parent=55 // pred_check
          %p439 = pneg %p158
        $region58: #{tpu_custom_call.1} parent=55 // pred_check_branch
          %441 = sbr.rel (%p439) target = $region60
        $region59: #{tpu_custom_call.1} parent=55 // pred_region
          %s442 = sand.u32 %s143, 1
          %s443 = scalar_lea.sflag [#allocation5], %s442
          %s444 = sand.u32 %s143, 1
          %s445 = smul.addr %s444, 16
          %s446 = scalar_lea.vmem [#allocation6], %s445
          %447 = dma.done %s443, 256
        $region60: #{tpu_custom_call.1} parent=55 // pred_fallthru
          _
      $region56: #{tpu_custom_call.1} parent=5 // pred_fallthru
        _
    $region6: #{tpu_custom_call.1} parent=1 // loop_footer
      %s20 = sadd.s32 1, %s16
    $region7: #{tpu_custom_call.1} parent=1 // loop_footer_branch
      %15 = sbr.rel target = $region3
    $region8: #{tpu_custom_call.1} parent=1 // loop_exit
      _
    %448 = vsyncpa [#allocation4], 1
    %s449 = scalar_lea.sflag [#allocation4], 1
    %450 = vsyncpa %s449, 1
    %451 = vsyncpa [#allocation5], 1
    %s452 = scalar_lea.sflag [#allocation5], 1
    %453 = vsyncpa %s452, 1

</llo_original>
